<compile_context>
chip_gen: v7x
topology: tpu7x:2x2x1
jax: 0.10.0
libtpu: 0.0.40
codegen_flags: <defaults>
</compile_context>

<pallas_src>
import functools

import jax
import jax.numpy as jnp
from jax.experimental import pallas as pl
from jax.experimental.pallas import tpu as pltpu


def _dwconv1d_kernel(x_ref, w_ref, b_ref, o_ref, *scratch, K, pad_l, pad_r):
    # x_ref : (1, TC, L)       input tile, native (B, C, L) layout
    # w_ref : (TC, K)          depthwise taps for this channel tile
    # b_ref : (TC, 1)          bias for this channel tile
    # o_ref : (1, TC, L_out)   output tile
    # scratch (only when padding): xp_ref (TC, L_pad) f32 padded slab
    TC = o_ref.shape[1]
    L = x_ref.shape[2]
    L_out = o_ref.shape[2]

    w = w_ref[...].astype(jnp.float32)                               # (TC, K)
    # Bias folded into the accumulator init.
    acc = jnp.broadcast_to(b_ref[...].astype(jnp.float32), (TC, L_out))

    if pad_l == 0 and pad_r == 0:
        # No padding: read each tap window straight from the input ref.
        for k in range(K):
            acc = acc + x_ref[0, :, k:k + L_out].astype(jnp.float32) * w[:, k:k + 1]
    else:
        xp_ref = scratch[0]
        # Zero only the pad stripes; the body overwrite makes a full-slab
        # zero redundant (saves a full vst pass per block).
        if pad_l > 0:
            xp_ref[:, :pad_l] = jnp.zeros((TC, pad_l), jnp.float32)
        if pad_r > 0:
            xp_ref[:, pad_l + L:] = jnp.zeros((TC, pad_r), jnp.float32)
        xp_ref[:, pad_l:pad_l + L] = x_ref[0, :, :].astype(jnp.float32)
        # Each tap is a lane-shifted window read from the ref (no value-slice
        # copies of a loaded slab).
        for k in range(K):
            acc = acc + xp_ref[:, k:k + L_out] * w[:, k:k + 1]

    o_ref[0, :, :] = acc.astype(o_ref.dtype)


def _sublane_granularity(dtype):
    bits = jnp.dtype(dtype).itemsize * 8
    if bits >= 32:
        return 8
    if bits == 16:
        return 16
    return 32


def _pick_channel_tile(C, L, dtype, budget=3 << 20):
    """Largest dtype-granular channel tile keeping one input block <= budget.
    The tile must divide C or equal C so the block's dims stay legal.
    NOTE: if C has no suitable divisor under the budget we fall back to the
    full C (correct, may just use more VMEM); an L-tiling-with-halo fallback
    is possible but not needed for FCPE's power-of-two channel counts."""
    itemsize = jnp.dtype(dtype).itemsize
    g = _sublane_granularity(dtype)
    if C * L * itemsize <= budget or C <= g:
        return C
    tc = (budget // (L * itemsize)) // g * g
    tc = max(g, min(tc, C))
    while tc > g and C % tc != 0:
        tc -= g
    if C % tc != 0:
        tc = C
    return tc


def depthwise_conv1d(x, weight, bias, padding):
    """x: (B, C, L); weight: (C, 1, K); bias: (C,); padding: (pad_l, pad_r)."""
    B, C, L = x.shape
    K = weight.shape[-1]
    pad_l, pad_r = padding
    L_pad = L + pad_l + pad_r
    L_out = L_pad - K + 1
    if L_out <= 0:
        raise ValueError(
            f"Non-positive output length: L={L}, padding={padding}, K={K}")

    w_ck = weight.reshape(C, K)          # tiny parameter reshapes (negligible)
    b_c1 = bias.reshape(C, 1)

    TC = _pick_channel_tile(C, L, x.dtype)
    n_ct = C // TC

    kernel = functools.partial(_dwconv1d_kernel, K=K, pad_l=pad_l, pad_r=pad_r)

    need_slab = (pad_l != 0) or (pad_r != 0)
    scratch_shapes = [pltpu.VMEM((TC, L_pad), jnp.float32)] if need_slab else []

    # Channel tile outermost, batch innermost: weight/bias index maps depend
    # only on the outer axis, so their blocks stay resident across the inner
    # batch loop.
    return pl.pallas_call(
        kernel,
        out_shape=jax.ShapeDtypeStruct((B, C, L_out), x.dtype),
        grid_spec=pltpu.PrefetchScalarGridSpec(
            num_scalar_prefetch=0,
            grid=(n_ct, B),
            in_specs=[
                pl.BlockSpec((1, TC, L), lambda c, b: (b, c, 0)),
                pl.BlockSpec((TC, K), lambda c, b: (c, 0)),
                pl.BlockSpec((TC, 1), lambda c, b: (c, 0)),
            ],
            out_specs=pl.BlockSpec((1, TC, L_out), lambda c, b: (b, c, 0)),
            scratch_shapes=scratch_shapes,
        ),
        compiler_params=pltpu.CompilerParams(
            dimension_semantics=("parallel", "parallel"),
            vmem_limit_bytes=32 * 1024 * 1024,
        ),
    )(x, w_ck, b_c1)


def _reference(x, weight, bias, padding):
    """Pure-JAX reference matching torch depthwise Conv1d + F.pad."""
    pad_l, pad_r = padding
    x_pad = jnp.pad(x, ((0, 0), (0, 0), (pad_l, pad_r)))
    K = weight.shape[-1]
    L_out = x_pad.shape[-1] - K + 1
    windows = jnp.stack(
        [x_pad[:, :, k:k + L_out] for k in range(K)], axis=-1)      # (B,C,L_out,K)
    return jnp.einsum("bctk,ck->bct", windows, weight[:, 0, :]) + bias[None, :, None]


if __name__ == "__main__":
    key = jax.random.PRNGKey(0)

    # Primary case: causal depthwise conv as used by FCPE's conformer block.
    B, C, L, K = 2, 4, 16, 3
    padding = (K - 1, 0)
    kx, kw, kb = jax.random.split(key, 3)
    x = jax.random.normal(kx, (B, C, L), dtype=jnp.float32)
    weight = jax.random.normal(kw, (C, 1, K), dtype=jnp.float32) * 0.1
    bias = jax.random.normal(kb, (C,), dtype=jnp.float32) * 0.1

    y = jax.block_until_ready(depthwise_conv1d(x, weight, bias, padding))
    y_ref = _reference(x, weight, bias, padding)
    assert y.shape == (B, C, L + padding[0] + padding[1] - K + 1)
    assert jnp.allclose(y, y_ref, atol=1e-5, rtol=1e-5)

    # Secondary case: symmetric padding, exercises the right-pad path.
    B2, C2, L2, K2 = 2, 8, 32, 3
    padding2 = (1, 1)
    k2x, k2w, k2b = jax.random.split(jax.random.PRNGKey(1), 3)
    x2 = jax.random.normal(k2x, (B2, C2, L2), dtype=jnp.float32)
    w2 = jax.random.normal(k2w, (C2, 1, K2), dtype=jnp.float32) * 0.1
    b2 = jax.random.normal(k2b, (C2,), dtype=jnp.float32) * 0.1

    y2 = jax.block_until_ready(depthwise_conv1d(x2, w2, b2, padding2))
    y2_ref = _reference(x2, w2, b2, padding2)
    assert jnp.allclose(y2, y2_ref, atol=1e-5, rtol=1e-5)

    # Zero-padding path (no scratch slab).
    y3 = jax.block_until_ready(depthwise_conv1d(x2, w2, b2, (0, 0)))
    y3_ref = _reference(x2, w2, b2, (0, 0))
    assert jnp.allclose(y3, y3_ref, atol=1e-5, rtol=1e-5)

    print("KERNEL_OK")
</pallas_src>

<mosaic_0001>
module attributes {stable_mosaic.version = 11 : i64} {
  func.func @_dwconv1d_kernel(%arg0: i32, %arg1: i32, %arg2: memref<1x4x16xf32, #tpu.memory_space<vmem>>, %arg3: memref<4x3xf32, #tpu.memory_space<vmem>>, %arg4: memref<4x1xf32, #tpu.memory_space<vmem>>, %arg5: memref<1x4x16xf32, #tpu.memory_space<vmem>>, %arg6: memref<4x18xf32, #tpu.memory_space<vmem>>) attributes {dimension_semantics = [#tpu.dimension_semantics<parallel>, #tpu.dimension_semantics<parallel>], iteration_bounds = array<i64: 1, 2>, scalar_prefetch = 0 : i64, scratch_operands = 1 : i64, tpu.core_type = #tpu.core_type<tc>, window_params = [{transform_indices = @transform_0, window_bounds = array<i64: 1, 4, 16>}, {transform_indices = @transform_1, window_bounds = array<i64: 4, 3>}, {transform_indices = @transform_2, window_bounds = array<i64: 4, 1>}, {transform_indices = @transform_3, window_bounds = array<i64: 1, 4, 16>}]} {
    %c0 = arith.constant 0 : index
    %c0_0 = arith.constant 0 : index
    %0 = vector.load %arg3[%c0, %c0_0] : memref<4x3xf32, #tpu.memory_space<vmem>>, vector<4x3xf32>
    %c0_1 = arith.constant 0 : index
    %c0_2 = arith.constant 0 : index
    %1 = vector.load %arg4[%c0_1, %c0_2] : memref<4x1xf32, #tpu.memory_space<vmem>>, vector<4x1xf32>
    %2 = vector.shape_cast %1 : vector<4x1xf32> to vector<4x1xf32>
    %3 = vector.broadcast %2 : vector<4x1xf32> to vector<4x16xf32>
    %cst = arith.constant 0.000000e+00 : f32
    %4 = vector.broadcast %cst : f32 to vector<4x2xf32>
    %c0_3 = arith.constant 0 : index
    %c0_4 = arith.constant 0 : index
    %5 = vector.load %arg6[%c0_3, %c0_4] : memref<4x18xf32, #tpu.memory_space<vmem>>, vector<4x2xf32>
    tpu.vector_store %arg6[%c0_3, %c0_4], %4 {strides = array<i32>} : memref<4x18xf32, #tpu.memory_space<vmem>>, vector<4x2xf32>,
    %c0_5 = arith.constant 0 : index
    %c0_6 = arith.constant 0 : index
    %c0_7 = arith.constant 0 : index
    %6 = vector.load %arg2[%c0_5, %c0_6, %c0_7] : memref<1x4x16xf32, #tpu.memory_space<vmem>>, vector<1x4x16xf32>
    %7 = vector.shape_cast %6 : vector<1x4x16xf32> to vector<4x16xf32>
    %c0_8 = arith.constant 0 : index
    %c2 = arith.constant 2 : index
    %8 = vector.load %arg6[%c0_8, %c2] : memref<4x18xf32, #tpu.memory_space<vmem>>, vector<4x16xf32>
    tpu.vector_store %arg6[%c0_8, %c2], %7 {strides = array<i32>} : memref<4x18xf32, #tpu.memory_space<vmem>>, vector<4x16xf32>,
    %c0_9 = arith.constant 0 : index
    %c0_10 = arith.constant 0 : index
    %9 = vector.load %arg6[%c0_9, %c0_10] : memref<4x18xf32, #tpu.memory_space<vmem>>, vector<4x16xf32>
    %10 = vector.extract_strided_slice %0 {offsets = [0, 0], sizes = [4, 1], strides = [1, 1]} : vector<4x3xf32> to vector<4x1xf32>
    %11 = vector.broadcast %10 : vector<4x1xf32> to vector<4x16xf32>
    %12 = arith.mulf %9, %11 : vector<4x16xf32>
    %13 = arith.addf %3, %12 : vector<4x16xf32>
    %c0_11 = arith.constant 0 : index
    %c1 = arith.constant 1 : index
    %14 = vector.load %arg6[%c0_11, %c1] : memref<4x18xf32, #tpu.memory_space<vmem>>, vector<4x16xf32>
    %15 = vector.extract_strided_slice %0 {offsets = [0, 1], sizes = [4, 1], strides = [1, 1]} : vector<4x3xf32> to vector<4x1xf32>
    %16 = vector.broadcast %15 : vector<4x1xf32> to vector<4x16xf32>
    %17 = arith.mulf %14, %16 : vector<4x16xf32>
    %18 = arith.addf %13, %17 : vector<4x16xf32>
    %c0_12 = arith.constant 0 : index
    %c2_13 = arith.constant 2 : index
    %19 = vector.load %arg6[%c0_12, %c2_13] : memref<4x18xf32, #tpu.memory_space<vmem>>, vector<4x16xf32>
    %20 = vector.extract_strided_slice %0 {offsets = [0, 2], sizes = [4, 1], strides = [1, 1]} : vector<4x3xf32> to vector<4x1xf32>
    %21 = vector.broadcast %20 : vector<4x1xf32> to vector<4x16xf32>
    %22 = arith.mulf %19, %21 : vector<4x16xf32>
    %23 = arith.addf %18, %22 : vector<4x16xf32>
    %c0_14 = arith.constant 0 : index
    %c0_15 = arith.constant 0 : index
    %c0_16 = arith.constant 0 : index
    %24 = vector.load %arg5[%c0_14, %c0_15, %c0_16] : memref<1x4x16xf32, #tpu.memory_space<vmem>>, vector<1x4x16xf32>
    %25 = vector.shape_cast %24 : vector<1x4x16xf32> to vector<4x16xf32>
    %26 = vector.shape_cast %23 : vector<4x16xf32> to vector<1x4x16xf32>
    tpu.vector_store %arg5[%c0_14, %c0_15, %c0_16], %26 {strides = array<i32>} : memref<1x4x16xf32, #tpu.memory_space<vmem>>, vector<1x4x16xf32>,
    return
  }
  func.func @transform_0(%arg0: i32, %arg1: i32) -> (i32, i32, i32) {
    %c0_i32 = arith.constant 0 : i32
    %c0_i32_0 = arith.constant 0 : i32
    return %arg1, %arg0, %c0_i32 : i32, i32, i32
  }
  func.func @transform_1(%arg0: i32, %arg1: i32) -> (i32, i32) {
    %c0_i32 = arith.constant 0 : i32
    %c0_i32_0 = arith.constant 0 : i32
    return %arg0, %c0_i32 : i32, i32
  }
  func.func @transform_2(%arg0: i32, %arg1: i32) -> (i32, i32) {
    %c0_i32 = arith.constant 0 : i32
    %c0_i32_0 = arith.constant 0 : i32
    return %arg0, %c0_i32 : i32, i32
  }
  func.func @transform_3(%arg0: i32, %arg1: i32) -> (i32, i32, i32) {
    %c0_i32 = arith.constant 0 : i32
    %c0_i32_0 = arith.constant 0 : i32
    return %arg1, %arg0, %c0_i32 : i32, i32, i32
  }
}

</mosaic_0001>

<llo_original>
// kernel: tpu_custom_call.1
$region0: #{tpu_custom_call.1}
  #allocation0 [shape = 'u32[]', space=smem, size = 0x4, offset = 0x4, fixed_abs, tag = 'smem constant byte address 0x4 - core index']
  #allocation1 [shape = 'u32[144,128]{1,0:T(1,128)}', space=vmem, size = 0x12000, scoped, tag = 'internal scratch']
  #allocation2 [shape = 'f32[4,18]{1,0:T(4,128)}', space=vmem, size = 0x800, scoped, tag = 'scratch operand']
  %s0 = inlined_call_operand.hbm [shape: f32[2,4,16], index: 0, kind: input, shape index: {}]
  %s1 = inlined_call_operand.vmem [shape: f32[4,3], index: 1, kind: input, shape index: {}]
  %s2 = inlined_call_operand.vmem [shape: f32[4,1], index: 2, kind: input, shape index: {}]
  %s3 = inlined_call_operand.hbm [shape: f32[2,4,16], index: 3, kind: output, shape index: {}]
  %s4 = sld [smem:[#allocation0]]
  $region49: #{tpu_custom_call.1} parent=0
    _
  %s6 = ssub.s32 1, %s4
  %s7 = scalar_select 0, %s6, %s4
  $region1: #{tpu_custom_call.1} parent=0
    #allocation3 [shape = 'u8[4096]{0}', space=vmem, size = 0x1000, scoped, tag = 'input window, operand 0']
    #allocation4 [shape = 's32[2]{0}', space=sflag, size = 0x8, scoped, tag = 'scoped memory for tpu_custom_call.1']
    #allocation5 [shape = 's32[2]{0}', space=sflag, size = 0x8, scoped, tag = 'scoped memory for tpu_custom_call.1']
    #allocation6 [shape = 'u8[4096]{0}', space=vmem, size = 0x1000, scoped, tag = 'output window, operand 0']
    %8 = vsyncpa [#allocation4], 0
    %s9 = scalar_lea.sflag [#allocation4], 1
    %10 = vsyncpa %s9, 0
    %11 = vsyncpa [#allocation5], 0
    %s12 = scalar_lea.sflag [#allocation5], 1
    %13 = vsyncpa %s12, 0
    loop: start=0, step=1, limit=4
    $region2: #{tpu_custom_call.1} parent=1 // loop_pre_header
      _
    $region3: #{tpu_custom_call.1} parent=1 // loop_header
      %s15 = sphi 0, %s19
      %p16 = scmp.ge.s32.totalorder %s15, 4
      %s22 = sphi 0, %s34
      %s23 = sphi 0, %s30
      %s24 = sphi 0, %s22
      %s25 = sphi 0, %s23
      %s26 = sphi 0, %s24
      %s27 = sphi 0, %s25
      %s39 = sphi 0, %s41
      %s42 = sphi 0, %s39
      %s43 = sphi 0, %s42
      %s59 = sphi 0, %s43
      %s65 = sphi 0, %s67
      %s68 = sphi 0, %s65
      %s69 = sphi 0, %s68
      %s85 = sphi 0, %s69
      %s91 = sphi 0, %s93
      %s94 = sphi 0, %s91
      %s95 = sphi 0, %s94
      %s111 = sphi 0, %s95
      %s119 = sphi 0, %s121
      %s122 = sphi 0, %s119
      %s123 = sphi 0, %s122
      %s139 = sphi 0, %s123
    $region4: #{tpu_custom_call.1} parent=1 // loop_header_branch
      %18 = sbr.rel (%p16) target = $region8
    $region5: #{tpu_custom_call.1} parent=1 // loop_body
      %s20 = ssub.s32 %s15, 1
      %s21 = ssub.s32 %s15, 2
      %s28 = sadd.s32 1, %s23
      %p29 = scmp.ge.s32.totalorder %s28, 2
      %s30 = scalar_select %p29, 0, %s28
      %s31 = sadd.s32 1, %s22
      %s32 = scalar_select %p29, %s31, %s22
      %p33 = scmp.ge.s32.totalorder %s32, 1
      %s34 = scalar_select %p33, 0, %s32
      %s35 = ssub.s32 %s23, %s30
      %s36 = ssub.s32 %s22, %s34
      %s37 = sor.u32 %s35, %s36
      %p38 = scmp.eq.s32.totalorder %s37, 0
      %s40 = sadd.s32 %s39, 1
      %s41 = scalar_select %p38, %s39, %s40
      %p44 = pneg %p38
      %p45 = scmp.eq.s32.totalorder %s15, 1
      %p46 = por %p44, %p45
      %p47 = scmp.ne.s32.totalorder %s39, %s42
      %p48 = scmp.eq.s32.totalorder %s15, 0
      %p49 = por %p47, %p48
      %p50 = scmp.ne.s32.totalorder %s39, %s42
      %p51 = scmp.eq.s32.totalorder %s20, 1
      %p52 = por %p50, %p51
      %p53 = scmp.ne.s32.totalorder %s42, %s43
      %p54 = scmp.eq.s32.totalorder %s20, 0
      %p55 = por %p53, %p54
      %p56 = scmp.ne.s32.totalorder %s42, %s43
      %p57 = scmp.eq.s32.totalorder %s21, 1
      %p58 = por %p56, %p57
      %p60 = scmp.ne.s32.totalorder %s43, %s59
      %p61 = scmp.eq.s32.totalorder %s21, 0
      %p62 = por %p60, %p61
      %s63 = ssub.s32 %s22, %s34
      %p64 = scmp.eq.s32.totalorder %s63, 0
      %s66 = sadd.s32 %s65, 1
      %s67 = scalar_select %p64, %s65, %s66
      %p70 = pneg %p64
      %p71 = scmp.eq.s32.totalorder %s15, 1
      %p72 = por %p70, %p71
      %p73 = scmp.ne.s32.totalorder %s65, %s68
      %p74 = scmp.eq.s32.totalorder %s15, 0
      %p75 = por %p73, %p74
      %p76 = scmp.ne.s32.totalorder %s65, %s68
      %p77 = scmp.eq.s32.totalorder %s20, 1
      %p78 = por %p76, %p77
      %p79 = scmp.ne.s32.totalorder %s68, %s69
      %p80 = scmp.eq.s32.totalorder %s20, 0
      %p81 = por %p79, %p80
      %p82 = scmp.ne.s32.totalorder %s68, %s69
      %p83 = scmp.eq.s32.totalorder %s21, 1
      %p84 = por %p82, %p83
      %p86 = scmp.ne.s32.totalorder %s69, %s85
      %p87 = scmp.eq.s32.totalorder %s21, 0
      %p88 = por %p86, %p87
      %s89 = ssub.s32 %s22, %s34
      %p90 = scmp.eq.s32.totalorder %s89, 0
      %s92 = sadd.s32 %s91, 1
      %s93 = scalar_select %p90, %s91, %s92
      %p96 = pneg %p90
      %p97 = scmp.eq.s32.totalorder %s15, 1
      %p98 = por %p96, %p97
      %p99 = scmp.ne.s32.totalorder %s91, %s94
      %p100 = scmp.eq.s32.totalorder %s15, 0
      %p101 = por %p99, %p100
      %p102 = scmp.ne.s32.totalorder %s91, %s94
      %p103 = scmp.eq.s32.totalorder %s20, 1
      %p104 = por %p102, %p103
      %p105 = scmp.ne.s32.totalorder %s94, %s95
      %p106 = scmp.eq.s32.totalorder %s20, 0
      %p107 = por %p105, %p106
      %p108 = scmp.ne.s32.totalorder %s94, %s95
      %p109 = scmp.eq.s32.totalorder %s21, 1
      %p110 = por %p108, %p109
      %p112 = scmp.ne.s32.totalorder %s95, %s111
      %p113 = scmp.eq.s32.totalorder %s21, 0
      %p114 = por %p112, %p113
      %s115 = ssub.s32 %s23, %s30
      %s116 = ssub.s32 %s22, %s34
      %s117 = sor.u32 %s115, %s116
      %p118 = scmp.eq.s32.totalorder %s117, 0
      %s120 = sadd.s32 %s119, 1
      %s121 = scalar_select %p118, %s119, %s120
      %p124 = pneg %p118
      %p125 = scmp.eq.s32.totalorder %s15, 1
      %p126 = por %p124, %p125
      %p127 = scmp.ne.s32.totalorder %s119, %s122
      %p128 = scmp.eq.s32.totalorder %s15, 0
      %p129 = por %p127, %p128
      %p130 = scmp.ne.s32.totalorder %s119, %s122
      %p131 = scmp.eq.s32.totalorder %s20, 1
      %p132 = por %p130, %p131
      %p133 = scmp.ne.s32.totalorder %s122, %s123
      %p134 = scmp.eq.s32.totalorder %s20, 0
      %p135 = por %p133, %p134
      %p136 = scmp.ne.s32.totalorder %s122, %s123
      %p137 = scmp.eq.s32.totalorder %s21, 1
      %p138 = por %p136, %p137
      %p140 = scmp.ne.s32.totalorder %s123, %s139
      %p141 = scmp.eq.s32.totalorder %s21, 0
      %p142 = por %p140, %p141
      %p143 = scmp.le.s32.totalorder 1, %s15
      %p144 = scmp.lt.s32.totalorder %s15, 3
      %p145 = pnand %p143, %p144
      %p146 = pneg %p145
      // Predicated region
      $region9: #{tpu_custom_call.1} parent=5 // pred_check
        _
      $region10: #{tpu_custom_call.1} parent=5 // pred_check_branch
        %148 = sbr.rel (%p145) target = $region12
      $region11: #{tpu_custom_call.1} parent=5 // pred_region
        %s149 = ssub.s32 %s15, 1
        // Predicated region
        $region13: #{tpu_custom_call.1} parent=11 // pred_check
          %p150 = pneg %p81
        $region14: #{tpu_custom_call.1} parent=11 // pred_check_branch
          %152 = sbr.rel (%p150) target = $region16
        $region15: #{tpu_custom_call.1} parent=11 // pred_region
          %p153 = scmp.lt.s32.totalorder %s24, 0
          %s154 = scalar_select %p153, %s24, 0
          %s155 = smul.addr %s154, 4
          %s156 = scalar_lea.vmem %s1, %s155
        $region16: #{tpu_custom_call.1} parent=11 // pred_fallthru
          _
        // Predicated region
        $region17: #{tpu_custom_call.1} parent=11 // pred_check
          %p157 = pneg %p107
        $region18: #{tpu_custom_call.1} parent=11 // pred_check_branch
          %159 = sbr.rel (%p157) target = $region20
        $region19: #{tpu_custom_call.1} parent=11 // pred_region
          %p160 = scmp.lt.s32.totalorder %s24, 0
          %s161 = scalar_select %p160, %s24, 0
          %s162 = smul.addr %s161, 4
          %s163 = scalar_lea.vmem %s2, %s162
        $region20: #{tpu_custom_call.1} parent=11 // pred_fallthru
          _
      $region12: #{tpu_custom_call.1} parent=5 // pred_fallthru
        _
      %p164 = scmp.lt.s32.totalorder %s15, 2
      // Predicated region
      $region21: #{tpu_custom_call.1} parent=5 // pred_check
        %p165 = pneg %p164
      $region22: #{tpu_custom_call.1} parent=5 // pred_check_branch
        %167 = sbr.rel (%p165) target = $region24
      $region23: #{tpu_custom_call.1} parent=5 // pred_region
        // Predicated region
        $region25: #{tpu_custom_call.1} parent=23 // pred_check
          %p168 = pneg %p49
        $region26: #{tpu_custom_call.1} parent=23 // pred_check_branch
          %170 = sbr.rel (%p168) target = $region28
        $region27: #{tpu_custom_call.1} parent=23 // pred_region
          %s171 = sand.u32 %s39, 1
          %s172 = scalar_lea.sflag [#allocation4], %s171
          %s173 = sand.u32 %s39, 1
          %s174 = smul.addr %s173, 4
          %s175 = scalar_lea.vmem [#allocation3], %s174
          %s177 = ssub.s32 64, 64
          %178 = vsyncadd %s172, %s177
          %s179 = sadd.s32 %s22, %s23
          %s180 = smul.addr %s179, 64
          %s181 = scalar_lea.hbm %s0, %s180
          %s183 = sshll.u32 %s175, 4
          %s184 = int_to_ptr.vmem [resolvable:$true] %s183
          %186 = dma.hbm_to_vmem [thread:$0]  %s181, 64, %s184, %s172
        $region28: #{tpu_custom_call.1} parent=23 // pred_fallthru
          _
      $region24: #{tpu_custom_call.1} parent=5 // pred_fallthru
        _
      %p187 = scmp.le.s32.totalorder 1, %s15
      %p188 = scmp.lt.s32.totalorder %s15, 3
      %p189 = pnand %p187, %p188
      %p190 = pneg %p189
      // Predicated region
      $region29: #{tpu_custom_call.1} parent=5 // pred_check
        _
      $region30: #{tpu_custom_call.1} parent=5 // pred_check_branch
        %192 = sbr.rel (%p189) target = $region32
      $region31: #{tpu_custom_call.1} parent=5 // pred_region
        %s193 = ssub.s32 %s15, 1
        %s194 = sand.u32 %s42, 1
        %s195 = scalar_lea.sflag [#allocation4], %s194
        %s196 = sand.u32 %s42, 1
        %s197 = smul.addr %s196, 4
        %s198 = scalar_lea.vmem [#allocation3], %s197
        // Predicated region
        $region33: #{tpu_custom_call.1} parent=31 // pred_check
          %p199 = pneg %p55
        $region34: #{tpu_custom_call.1} parent=31 // pred_check_branch
          %201 = sbr.rel (%p199) target = $region36
        $region35: #{tpu_custom_call.1} parent=31 // pred_region
          %202 = dma.done %s195, 64
        $region36: #{tpu_custom_call.1} parent=31 // pred_fallthru
          _
        %s203 = sand.u32 %s42, 1
        %s204 = scalar_lea.sflag [#allocation4], %s203
        %s205 = sand.u32 %s42, 1
        %s206 = smul.addr %s205, 4
        %s207 = scalar_lea.vmem [#allocation3], %s206
        %p208 = pneg %p55
        %p209 = pneg %p52
        %p210 = scmp.lt.s32.totalorder %s24, 0
        %s211 = scalar_select %p210, %s24, 0
        %s212 = smul.addr %s211, 4
        %s213 = scalar_lea.vmem %s1, %s212
        %p214 = pneg %p81
        %p215 = pneg %p78
        %p216 = scmp.lt.s32.totalorder %s24, 0
        %s217 = scalar_select %p216, %s24, 0
        %s218 = smul.addr %s217, 4
        %s219 = scalar_lea.vmem %s2, %s218
        %p220 = pneg %p107
        %p221 = pneg %p104
        %p222 = pneg %p135
        %p223 = pneg %p132
        %s224 = sand.u32 %s122, 1
        %s225 = scalar_lea.sflag [#allocation5], %s224
        %s226 = sand.u32 %s122, 1
        %s227 = smul.addr %s226, 4
        %s228 = scalar_lea.vmem [#allocation6], %s227
        %p229 = scmp.lt.s32.totalorder %s24, 0
        %s230 = scalar_select %p229, %s24, 0
        %s231 = smul.addr %s230, 4
        %s232 = scalar_lea.vmem %s1, %s231
        %p233 = scmp.lt.s32.totalorder %s24, 0
        %s234 = scalar_select %p233, %s24, 0
        %s235 = smul.addr %s234, 4
        %s236 = scalar_lea.vmem %s2, %s235
        %v237 = vld [vmem:[%s232] sm:$0xf]
        %v238 = vld [vmem:[%s236] sm:$0xf]
        %240 = vset.pattern.permute.xlu0 0
        %241 = vperm.xlu0 %240, %v238
        %v242 = vpop.permute.xlu0 %241
        %vm244 = vcmask 11264
        %245 = vst.msk [vmem:[#allocation2] sm:$0xf] %vm244, 0.0
        %v246 = vld [vmem:[%s198] sm:$0xf]
        %248 = vrot.lane.b32.xlu0 %v246, 2
        %v249 = vpop.permute.xlu0 %248
        %vm251 = vcmask 142352
        %252 = vst.msk [vmem:[#allocation2] sm:$0xf] %vm251, %v249
        %v253 = vld [vmem:[#allocation2] sm:$0xf]
        %255 = vset.pattern.permute.xlu0 0
        %256 = vperm.xlu0 %255, %v237
        %v257 = vpop.permute.xlu0 %256
        %v259 = vmul.f32 %v253, %v257
        %v260 = vadd.f32 %v242, %v259
        %261 = vset.pattern.permute.xlu0 1
        %262 = vperm.xlu0 %261, %v237
        %v263 = vpop.permute.xlu0 %262
        %v265 = vmul.f32 %v253, %v263
        %267 = vrot.lane.b32.xlu0 %v265, 127
        %v268 = vpop.permute.xlu0 %267
        %v270 = vadd.f32 %v260, %v268
        %271 = vset.pattern.permute.xlu0 2
        %272 = vperm.xlu0 %271, %v237
        %v273 = vpop.permute.xlu0 %272
        %v275 = vmul.f32 %v253, %v273
        %277 = vrot.lane.b32.xlu0 %v275, 126
        %v278 = vpop.permute.xlu0 %277
        %v280 = vadd.f32 %v270, %v278
        %vm281 = vcmask 125952
        %282 = vst.msk [vmem:[%s228] sm:$0xf] %vm281, %v280
        %s283 = sand.u32 %s122, 1
        %s284 = scalar_lea.sflag [#allocation5], %s283
        %s285 = sand.u32 %s122, 1
        %s286 = smul.addr %s285, 4
        %s287 = scalar_lea.vmem [#allocation6], %s286
        // Predicated region
        $region37: #{tpu_custom_call.1} parent=31 // pred_check
          %p288 = pneg %p132
        $region38: #{tpu_custom_call.1} parent=31 // pred_check_branch
          %290 = sbr.rel (%p288) target = $region40
        $region39: #{tpu_custom_call.1} parent=31 // pred_region
          %s292 = ssub.s32 64, 64
          %293 = vsyncadd %s284, %s292
          %s294 = sadd.s32 %s24, %s25
          %s295 = smul.addr %s294, 64
          %s296 = scalar_lea.hbm %s3, %s295
          %s298 = sshll.u32 %s287, 4
          %s299 = int_to_ptr.vmem [resolvable:$true] %s298
          %301 = dma.vmem_to_hbm [thread:$0]  %s299, 64, %s296, %s284
        $region40: #{tpu_custom_call.1} parent=31 // pred_fallthru
          _
      $region32: #{tpu_custom_call.1} parent=5 // pred_fallthru
        _
      %p302 = scmp.le.s32.totalorder 2, %s15
      // Predicated region
      $region41: #{tpu_custom_call.1} parent=5 // pred_check
        %p303 = pneg %p302
      $region42: #{tpu_custom_call.1} parent=5 // pred_check_branch
        %305 = sbr.rel (%p303) target = $region44
      $region43: #{tpu_custom_call.1} parent=5 // pred_region
        %s306 = ssub.s32 %s15, 2
        // Predicated region
        $region45: #{tpu_custom_call.1} parent=43 // pred_check
          %p307 = pneg %p138
        $region46: #{tpu_custom_call.1} parent=43 // pred_check_branch
          %309 = sbr.rel (%p307) target = $region48
        $region47: #{tpu_custom_call.1} parent=43 // pred_region
          %s310 = sand.u32 %s123, 1
          %s311 = scalar_lea.sflag [#allocation5], %s310
          %s312 = sand.u32 %s123, 1
          %s313 = smul.addr %s312, 4
          %s314 = scalar_lea.vmem [#allocation6], %s313
          %315 = dma.done %s311, 64
        $region48: #{tpu_custom_call.1} parent=43 // pred_fallthru
          _
      $region44: #{tpu_custom_call.1} parent=5 // pred_fallthru
        _
    $region6: #{tpu_custom_call.1} parent=1 // loop_footer
      %s19 = sadd.s32 1, %s15
    $region7: #{tpu_custom_call.1} parent=1 // loop_footer_branch
      %14 = sbr.rel target = $region3
    $region8: #{tpu_custom_call.1} parent=1 // loop_exit
      _
    %316 = vsyncpa [#allocation4], 1
    %s317 = scalar_lea.sflag [#allocation4], 1
    %318 = vsyncpa %s317, 1
    %319 = vsyncpa [#allocation5], 1
    %s320 = scalar_lea.sflag [#allocation5], 1
    %321 = vsyncpa %s320, 1

</llo_original>
